<compile_context>
chip_gen: v7x
topology: tpu7x:2x2x1
jax: 0.10.0
libtpu: 0.0.40
codegen_flags: <defaults>
</compile_context>

<pallas_src>
import functools

import jax
import jax.numpy as jnp
from jax import lax
from jax.experimental import pallas as pl
from jax.experimental.pallas import tpu as pltpu


def _round_up(x: int, m: int) -> int:
    return ((x + m - 1) // m) * m


def _cdiv(a: int, b: int) -> int:
    return -(-a // b)


def _self_output_kernel(x_ref, w_ref, b_ref, o_ref):
    # x_ref: (tile_rows, Hp) activations (compute dtype, e.g. bf16)
    # w_ref: (Hp, Hp) weight already transposed to (in, out) -> MXU-native contraction
    # b_ref: (1, Hp) bias in f32
    # o_ref: (tile_rows, Hp) output (original dtype)
    acc = jnp.dot(x_ref[...], w_ref[...], preferred_element_type=jnp.float32)
    o_ref[...] = (acc + b_ref[...]).astype(o_ref.dtype)


def _self_output_residual_kernel(x_ref, r_ref, w_ref, b_ref, o_ref):
    acc = jnp.dot(x_ref[...], w_ref[...], preferred_element_type=jnp.float32)
    acc = acc + b_ref[...] + r_ref[...].astype(jnp.float32)
    o_ref[...] = acc.astype(o_ref.dtype)


def _choose_tile_rows(rows: int, compute_dtype) -> int:
    # Sublane packing: 16 rows/vreg for bf16, 8 for f32.
    sub = 16 if jnp.dtype(compute_dtype) == jnp.bfloat16 else 8
    base = 1024 if jnp.dtype(compute_dtype) == jnp.bfloat16 else 512
    if rows > base:
        return base
    # Small-row path (B=1-2 ViT inference): split into >=2 tiles so both v7x
    # TensorCores get work instead of collapsing to a single grid step.
    half = _round_up(_cdiv(rows, 2), sub)
    return max(sub, half)


@functools.partial(jax.jit,
                   static_argnames=("tile_rows", "compute_dtype", "fuse_residual"))
def vit_self_output(hidden_states, input_tensor, weight, bias, *,
                    tile_rows=None, compute_dtype=jnp.bfloat16, fuse_residual=False):
    """hidden_states, input_tensor: [B, S, H]; weight: [H, H] (PyTorch out x in);
    bias: [H].  Returns dense(hidden_states); dropout is identity (eval mode).
    input_tensor is unused unless fuse_residual=True (residual normally lives in
    ViTLayer, matching the original module)."""
    B, S, H = hidden_states.shape
    rows = B * S
    out_dtype = hidden_states.dtype
    cdtype = jnp.dtype(compute_dtype)

    if tile_rows is None:
        tile_rows = _choose_tile_rows(rows, cdtype)

    # Lane pad only when H is not a multiple of 128 (tiny demo H=32); rows are NOT
    # padded -- Pallas handles the ragged last row block with masked stores.
    Hp = H if H % 128 == 0 else _round_up(H, 128)
    grid = (_cdiv(rows, tile_rows),)

    x2d = hidden_states.reshape(rows, H).astype(cdtype)
    wT = weight.astype(cdtype).T                    # (in, out): no in-kernel transpose
    b2d = bias.astype(jnp.float32).reshape(1, H)    # bias stays f32 (tiny, exact add)
    if Hp != H:
        x2d = jnp.pad(x2d, ((0, 0), (0, Hp - H)))
        wT = jnp.pad(wT, ((0, Hp - H), (0, Hp - H)))
        b2d = jnp.pad(b2d, ((0, 0), (0, Hp - H)))

    c_item = cdtype.itemsize
    o_item = jnp.dtype(out_dtype).itemsize

    x_spec = pl.BlockSpec((tile_rows, Hp), lambda i: (i, 0))
    w_spec = pl.BlockSpec((Hp, Hp), lambda i: (0, 0), pipeline_mode=pl.Buffered(1))
    b_spec = pl.BlockSpec((1, Hp), lambda i: (0, 0), pipeline_mode=pl.Buffered(1))
    out_spec = pl.BlockSpec((tile_rows, Hp), lambda i: (i, 0))

    if fuse_residual:
        r_item = jnp.dtype(input_tensor.dtype).itemsize
        r2d = input_tensor.reshape(rows, H)
        if Hp != H:
            r2d = jnp.pad(r2d, ((0, 0), (0, Hp - H)))
        kernel = _self_output_residual_kernel
        operands = (x2d, r2d, wT, b2d)
        in_specs = [x_spec, x_spec, w_spec, b_spec]
    else:
        r_item = 0
        kernel = _self_output_kernel
        operands = (x2d, wT, b2d)
        in_specs = [x_spec, w_spec, b_spec]

    # Real VMEM footprint: double-buffered x/out (+residual), single-buffered W/bias.
    tile_elems = tile_rows * Hp
    footprint = (tile_elems * c_item * 2
                 + tile_elems * o_item * 2
                 + Hp * Hp * c_item
                 + Hp * 4
                 + (tile_elems * r_item * 2 if fuse_residual else 0))
    vmem_limit = int(min(max(2 * footprint, 8 << 20), 32 << 20))

    cost = pl.CostEstimate(
        flops=2 * rows * Hp * Hp,
        transcendentals=0,
        bytes_accessed=(rows * Hp * c_item            # x
                        + Hp * Hp * c_item            # W
                        + Hp * 4                      # bias
                        + rows * Hp * o_item          # out
                        + (rows * Hp * r_item if fuse_residual else 0)),
    )

    out2d = pl.pallas_call(
        kernel,
        out_shape=jax.ShapeDtypeStruct((rows, Hp), out_dtype),
        grid_spec=pltpu.PrefetchScalarGridSpec(
            num_scalar_prefetch=0,
            grid=grid,
            in_specs=in_specs,
            out_specs=out_spec,
        ),
        compiler_params=pltpu.CompilerParams(
            dimension_semantics=("parallel",),
            vmem_limit_bytes=vmem_limit,
        ),
        cost_estimate=cost,
    )(*operands)

    if Hp != H:
        out2d = out2d[:, :H]
    return out2d.reshape(B, S, H)


def _reference(hidden_states, weight, bias, compute_dtype=jnp.bfloat16):
    """Plain-JAX Linear with matching bf16-compute / f32-accumulate semantics."""
    B, S, H = hidden_states.shape
    y = lax.dot_general(
        hidden_states.reshape(-1, H).astype(compute_dtype),
        weight.astype(compute_dtype),
        dimension_numbers=(((1,), (1,)), ((), ())),       # x @ W.T
        preferred_element_type=jnp.float32,
    ) + bias.astype(jnp.float32)
    return y.reshape(B, S, H).astype(hidden_states.dtype)


if __name__ == "__main__":
    # Small, ViT-like shapes: batch=2, seq=8, hidden=32
    B, S, H = 2, 8, 32
    key = jax.random.PRNGKey(0)
    k_x, k_res, k_w, k_b = jax.random.split(key, 4)

    hidden_states = jax.random.normal(k_x, (B, S, H), dtype=jnp.float32)
    input_tensor = jax.random.normal(k_res, (B, S, H), dtype=jnp.float32)

    # Deterministic parameter init (nn.Linear(hidden, hidden)): weight (H, H), bias (H,)
    bound = 1.0 / (H ** 0.5)
    weight = jax.random.uniform(k_w, (H, H), minval=-bound, maxval=bound,
                                dtype=jnp.float32)
    bias = jax.random.uniform(k_b, (H,), minval=-bound, maxval=bound,
                              dtype=jnp.float32)

    out = jax.block_until_ready(
        vit_self_output(hidden_states, input_tensor, weight, bias))
    ref = _reference(hidden_states, weight, bias)
    assert out.shape == (B, S, H)
    assert jnp.allclose(out, ref, atol=2e-3, rtol=2e-3)

    # Optional fused-residual path (semantics of dense(x) + input_tensor).
    out_res = jax.block_until_ready(
        vit_self_output(hidden_states, input_tensor, weight, bias, fuse_residual=True))
    assert jnp.allclose(out_res, ref + input_tensor, atol=2e-3, rtol=2e-3)

    # Realistic ViT-Base shape: multi-step row grid, ragged last block, H multiple
    # of 128 (no lane pad, no slices), bf16 streaming, f32 accumulation.
    B2, S2, H2 = 2, 197, 768
    k1, k2, k3 = jax.random.split(jax.random.PRNGKey(1), 3)
    hs2 = jax.random.normal(k1, (B2, S2, H2), dtype=jnp.float32)
    w2 = jax.random.normal(k2, (H2, H2), dtype=jnp.float32) * 0.02
    b2 = jax.random.normal(k3, (H2,), dtype=jnp.float32) * 0.02
    out2 = jax.block_until_ready(vit_self_output(hs2, hs2, w2, b2))
    ref2 = _reference(hs2, w2, b2)
    assert jnp.allclose(out2, ref2, atol=5e-3, rtol=5e-3)

    print("KERNEL_OK")
</pallas_src>

<mosaic_0001>
module attributes {stable_mosaic.version = 11 : i64} {
  func.func @_self_output_kernel(%arg0: i32, %arg1: memref<16x128xbf16, #tpu.memory_space<vmem>>, %arg2: memref<128x128xbf16, #tpu.memory_space<vmem>>, %arg3: memref<1x128xf32, #tpu.memory_space<vmem>>, %arg4: memref<16x128xf32, #tpu.memory_space<vmem>>) attributes {dimension_semantics = [#tpu.dimension_semantics<parallel>], iteration_bounds = array<i64: 1>, scalar_prefetch = 0 : i64, scratch_operands = 0 : i64, tpu.core_type = #tpu.core_type<tc>, window_params = [{transform_indices = @transform_0, window_bounds = array<i64: 16, 128>}, {pipeline_mode = #tpu.pipeline_mode<synchronous>, transform_indices = @transform_1, window_bounds = array<i64: 128, 128>}, {pipeline_mode = #tpu.pipeline_mode<synchronous>, transform_indices = @transform_2, window_bounds = array<i64: 1, 128>}, {transform_indices = @transform_3, window_bounds = array<i64: 16, 128>}]} {
    %c0 = arith.constant 0 : index
    %c0_0 = arith.constant 0 : index
    %0 = vector.load %arg1[%c0, %c0_0] : memref<16x128xbf16, #tpu.memory_space<vmem>>, vector<16x128xbf16>
    %c0_1 = arith.constant 0 : index
    %c0_2 = arith.constant 0 : index
    %1 = vector.load %arg2[%c0_1, %c0_2] : memref<128x128xbf16, #tpu.memory_space<vmem>>, vector<128x128xbf16>
    %cst = arith.constant dense<0.000000e+00> : vector<16x128xf32>
    %2 = tpu.matmul %0, %1, %cst {dimension_numbers = #tpu.dot_dimension_numbers<[1], [0], [0], [1], [0, 0, 1, 1], [], []>} : vector<16x128xbf16>, vector<128x128xbf16>, vector<16x128xf32> -> vector<16x128xf32>
    %c0_3 = arith.constant 0 : index
    %c0_4 = arith.constant 0 : index
    %3 = vector.load %arg3[%c0_3, %c0_4] : memref<1x128xf32, #tpu.memory_space<vmem>>, vector<1x128xf32>
    %4 = vector.broadcast %3 : vector<1x128xf32> to vector<16x128xf32>
    %5 = arith.addf %2, %4 : vector<16x128xf32>
    %c0_5 = arith.constant 0 : index
    %c0_6 = arith.constant 0 : index
    %6 = vector.load %arg4[%c0_5, %c0_6] : memref<16x128xf32, #tpu.memory_space<vmem>>, vector<16x128xf32>
    tpu.vector_store %arg4[%c0_5, %c0_6], %5 {strides = array<i32>} : memref<16x128xf32, #tpu.memory_space<vmem>>, vector<16x128xf32>,
    return
  }
  func.func @transform_0(%arg0: i32) -> (i32, i32) {
    %c0_i32 = arith.constant 0 : i32
    %c0_i32_0 = arith.constant 0 : i32
    return %arg0, %c0_i32 : i32, i32
  }
  func.func @transform_1(%arg0: i32) -> (i32, i32) {
    %c0_i32 = arith.constant 0 : i32
    %c0_i32_0 = arith.constant 0 : i32
    %c0_i32_1 = arith.constant 0 : i32
    return %c0_i32, %c0_i32_0 : i32, i32
  }
  func.func @transform_2(%arg0: i32) -> (i32, i32) {
    %c0_i32 = arith.constant 0 : i32
    %c0_i32_0 = arith.constant 0 : i32
    %c0_i32_1 = arith.constant 0 : i32
    return %c0_i32, %c0_i32_0 : i32, i32
  }
  func.func @transform_3(%arg0: i32) -> (i32, i32) {
    %c0_i32 = arith.constant 0 : i32
    %c0_i32_0 = arith.constant 0 : i32
    return %arg0, %c0_i32 : i32, i32
  }
}

</mosaic_0001>

<llo_original>
// kernel: vit_self_output.1
$region0: #{vit_self_output.1}
  #allocation0 [shape = 'u32[]', space=smem, size = 0x4, offset = 0x4, fixed_abs, tag = 'smem constant byte address 0x4 - core index']
  #allocation1 [shape = 'u32[144,128]{1,0:T(1,128)}', space=vmem, size = 0x12000, scoped, tag = 'internal scratch']
  %s0 = inlined_call_operand.vmem [shape: bf16[16,128], index: 0, kind: input, shape index: {}]
  %s1 = inlined_call_operand.vmem [shape: bf16[128,128], index: 1, kind: input, shape index: {}]
  %s2 = inlined_call_operand.vmem [shape: f32[1,128], index: 2, kind: input, shape index: {}]
  %s3 = inlined_call_operand.vmem [shape: f32[16,128], index: 3, kind: output, shape index: {}]
  %s4 = sld [smem:[#allocation0]]
  $region22: #{vit_self_output.1} parent=0
    _
  %s6 = ssub.s32 1, %s4
  %s7 = scalar_select 0, %s6, %s4
  // Predicated region
  $region2: #{vit_self_output.1} parent=0 // pred_check
    _
  $region3: #{vit_self_output.1} parent=0 // pred_check_branch
    %9 = sbr.rel (0) target = $region5
  $region4: #{vit_self_output.1} parent=0 // pred_region
    _
  $region5: #{vit_self_output.1} parent=0 // pred_fallthru
    _
  // Predicated region
  $region6: #{vit_self_output.1} parent=0 // pred_check
    _
  $region7: #{vit_self_output.1} parent=0 // pred_check_branch
    %11 = sbr.rel (0) target = $region9
  $region8: #{vit_self_output.1} parent=0 // pred_region
    _
  $region9: #{vit_self_output.1} parent=0 // pred_fallthru
    _
  // Predicated region
  $region10: #{vit_self_output.1} parent=0 // pred_check
    _
  $region11: #{vit_self_output.1} parent=0 // pred_check_branch
    %13 = sbr.rel (0) target = $region13
  $region12: #{vit_self_output.1} parent=0 // pred_region
    _
  $region13: #{vit_self_output.1} parent=0 // pred_fallthru
    _
  %v15 = vld [vmem:[%s0] sm:$0xf]
  %v16 = vld [vmem:[%s0 + $0x4] sm:$0xf]
  %v17 = vld [vmem:[%s1] sm:$0xf]
  %v18 = vld [vmem:[%s1 + $0x4] sm:$0xf]
  %v19 = vld [vmem:[%s1 + $0x8] sm:$0xf]
  %v20 = vld [vmem:[%s1 + $0xc] sm:$0xf]
  %v21 = vld [vmem:[%s1 + $0x10] sm:$0xf]
  %v22 = vld [vmem:[%s1 + $0x14] sm:$0xf]
  %v23 = vld [vmem:[%s1 + $0x18] sm:$0xf]
  %v24 = vld [vmem:[%s1 + $0x1c] sm:$0xf]
  %v25 = vld [vmem:[%s1 + $0x20] sm:$0xf]
  %v26 = vld [vmem:[%s1 + $0x24] sm:$0xf]
  %v27 = vld [vmem:[%s1 + $0x28] sm:$0xf]
  %v28 = vld [vmem:[%s1 + $0x2c] sm:$0xf]
  %v29 = vld [vmem:[%s1 + $0x30] sm:$0xf]
  %v30 = vld [vmem:[%s1 + $0x34] sm:$0xf]
  %v31 = vld [vmem:[%s1 + $0x38] sm:$0xf]
  %v32 = vld [vmem:[%s1 + $0x3c] sm:$0xf]
  %v33 = vld [vmem:[%s2] sm:$0x1]
  %v35 = vlaneseq
  %v36 = vshrl.u32 %v35, 7
  %v37 = vsub.s32 0, %v36
  %v38 = vrot.slane %v33, %v37
  %v42 = vunpack.c.l.b16 %v15
  %v43 = vunpack.c.l.b16 %v16
  %v44 = vpack.c.b16 %v43, %v42
  %v62 = vunpack.c.l.b16 %v17
  %v63 = vunpack.c.l.b16 %v18
  %v64 = vunpack.c.l.b16 %v19
  %v65 = vunpack.c.l.b16 %v20
  %v66 = vunpack.c.l.b16 %v21
  %v67 = vunpack.c.l.b16 %v22
  %v68 = vunpack.c.l.b16 %v23
  %v69 = vunpack.c.l.b16 %v24
  %v70 = vunpack.c.l.b16 %v25
  %v71 = vunpack.c.l.b16 %v26
  %v72 = vunpack.c.l.b16 %v27
  %v73 = vunpack.c.l.b16 %v28
  %v74 = vunpack.c.l.b16 %v29
  %v75 = vunpack.c.l.b16 %v30
  %v76 = vunpack.c.l.b16 %v31
  %v77 = vunpack.c.l.b16 %v32
  %v78 = vpack.c.b16 %v63, %v62
  %v79 = vpack.c.b16 %v65, %v64
  %v80 = vpack.c.b16 %v67, %v66
  %v81 = vpack.c.b16 %v69, %v68
  %v82 = vpack.c.b16 %v71, %v70
  %v83 = vpack.c.b16 %v73, %v72
  %v84 = vpack.c.b16 %v75, %v74
  %v85 = vpack.c.b16 %v77, %v76
  %94 = vmatprep.subr.bf16.mxu0 0
  %95 = vmatpush1.bf16.msra.mxu0 %v78
  %96 = vmatprep.subr.bf16.mxu0 0
  %97 = vmatpush1.bf16.msra.mxu0 %v79
  %98 = vmatprep.subr.bf16.mxu0 0
  %99 = vmatpush1.bf16.msra.mxu0 %v80
  %100 = vmatprep.subr.bf16.mxu0 0
  %101 = vmatpush1.bf16.msra.mxu0 %v81
  %102 = vmatprep.subr.bf16.mxu0 0
  %103 = vmatpush1.bf16.msra.mxu0 %v82
  %104 = vmatprep.subr.bf16.mxu0 0
  %105 = vmatpush1.bf16.msra.mxu0 %v83
  %106 = vmatprep.subr.bf16.mxu0 0
  %107 = vmatpush1.bf16.msra.mxu0 %v84
  %108 = vmatprep.subr.bf16.mxu0 0
  %109 = vmatpush1.bf16.msra.mxu0 %v85
  %110 = vmatprep.subr.bf16.mxu0 0
  %111 = vmatpush1.bf16.msra.mxu0 0
  %112 = vmatprep.subr.bf16.mxu0 0
  %113 = vmatpush1.bf16.msra.mxu0 0
  %114 = vmatprep.subr.bf16.mxu0 0
  %115 = vmatpush1.bf16.msra.mxu0 0
  %116 = vmatprep.subr.bf16.mxu0 0
  %117 = vmatpush1.bf16.msra.mxu0 0
  %118 = vmatprep.subr.bf16.mxu0 0
  %119 = vmatpush1.bf16.msra.mxu0 0
  %120 = vmatprep.subr.bf16.mxu0 0
  %121 = vmatpush1.bf16.msra.mxu0 0
  %122 = vmatprep.subr.bf16.mxu0 0
  %123 = vmatpush1.bf16.msra.mxu0 0
  %124 = vmatprep.subr.bf16.mxu0 0
  %125 = vmatpush1.bf16.msra.mxu0 0
  %126 = vmatprep.mubr.bf16.mxu0 0
  %127 = vmatmul.mubr.bf16.gmra.mrb[0].mxu0 %v44
  %v128 = vpop.f32.mrb[0].mxu0
  %v129 = vadd.f32 %v38, %v128
  %v130 = vpop.f32.mrb[0].mxu0
  %v131 = vpop.f32.mrb[0].mxu0
  %v132 = vadd.f32 %v38, %v131
  %v133 = vpop.f32.mrb[0].mxu0
  %134 = vdwg.mxu0
  %135 = vst [vmem:[%s3] sm:$0xff] %v129
  %136 = vst [vmem:[%s3 + $0x8] sm:$0xff] %v132
  // Predicated region
  $region14: #{vit_self_output.1} parent=0 // pred_check
    _
  $region15: #{vit_self_output.1} parent=0 // pred_check_branch
    %138 = sbr.rel (0) target = $region17
  $region16: #{vit_self_output.1} parent=0 // pred_region
    _
  $region17: #{vit_self_output.1} parent=0 // pred_fallthru
    _
  // Predicated region
  $region18: #{vit_self_output.1} parent=0 // pred_check
    _
  $region19: #{vit_self_output.1} parent=0 // pred_check_branch
    %140 = sbr.rel (0) target = $region21
  $region20: #{vit_self_output.1} parent=0 // pred_region
    _
  $region21: #{vit_self_output.1} parent=0 // pred_fallthru
    _

</llo_original>
